<compile_context>
chip_gen: v5e
topology: v5e:2x2
jax: 0.10.0
libtpu: 0.0.40
codegen_flags: <defaults>
</compile_context>

<pallas_src>
import functools

import jax
import jax.numpy as jnp
from jax.experimental import pallas as pl
from jax.experimental.pallas import tpu as pltpu


# ---------------------------------------------------------------------------
# Tiling / VMEM budgeting helpers
# ---------------------------------------------------------------------------

def _round_up(x, m):
    return ((x + m - 1) // m) * m


def _round_down(x, m):
    return (x // m) * m


def _vmem_capacity_bytes():
    """Physical VMEM per TensorCore; conservative fallback = v7x's 64 MiB."""
    try:
        cap = int(pltpu.get_tpu_info().vmem_capacity_bytes)
        if cap > 0:
            return cap
    except Exception:
        pass
    return 64 * 1024 * 1024


def _choose_tile_rows(rows, width, itemsize, vmem_capacity):
    """Pick a row tile for a (rows, width) streaming layernorm.

    Returns (tile_rows, row_align, vmem_limit_cap).
      * request at most 3/4 of physical VMEM (48 MiB v7x, 96 MiB v5e/v6e),
      * working set counted per row: double-buffered in + out I/O blocks plus
        ~5 fp32 elementwise intermediates (so bf16 inputs don't spill),
      * target ~8 MiB I/O blocks (byte-based, no fixed row cap),
      * keep >= 2 grid steps whenever there is enough work so the single
        "parallel" axis shards rows across v7x's two TensorCores.
    """
    row_align = 8 * max(1, 4 // max(1, itemsize))      # 8 f32 / 16 bf16 / 32 i8
    limit_cap = (3 * vmem_capacity) // 4               # never request full VMEM
    budget = max(4 << 20, limit_cap - (4 << 20))       # compiler-scratch headroom

    per_row_ws = width * (4 * itemsize + 5 * 4)        # 2x in + 2x out + 5 f32 tmp
    max_rows = max(row_align, _round_down(budget // per_row_ws, row_align))

    target_rows = max(row_align, (8 << 20) // max(1, width * itemsize))
    tile = min(max_rows, _round_up(target_rows, row_align))

    # Never bigger than the (sublane-aligned) whole array.
    tile = min(tile, _round_up(rows, row_align))

    # At least 2 grid steps when there is enough work (v7x 2-TC sharding).
    if rows > row_align:
        half = max(row_align, _round_up((rows + 1) // 2, row_align))
        tile = min(tile, half)

    return tile, row_align, limit_cap


# ---------------------------------------------------------------------------
# Kernels
# ---------------------------------------------------------------------------

def _layernorm_rows_kernel(x_ref, a_ref, b_ref, o_ref, *, eps):
    # x_ref: (TILE, D); a_ref/b_ref: (1, D); o_ref: (TILE, D)
    x = x_ref[...].astype(jnp.float32)
    d = x.shape[-1]

    mean = jnp.mean(x, axis=-1, keepdims=True)
    diff = x - mean
    # torch.std default is unbiased -> divide by (D - 1)
    var = jnp.sum(diff * diff, axis=-1, keepdims=True) / jnp.float32(d - 1)
    inv = pl.reciprocal(jnp.sqrt(var) + jnp.float32(eps), approx=False)

    a = a_ref[...].astype(jnp.float32)
    b = b_ref[...].astype(jnp.float32)
    o_ref[...] = (diff * (a * inv) + b).astype(o_ref.dtype)


def _layernorm_packed_kernel(x_ref, a_ref, b_ref, m_ref, o_ref, *, eps, d):
    # Lane-dense path for logical D < 128 (D divides 128): each kernel row
    # holds P = 128/D logical rows side by side (width = 128). Segmented
    # per-row mean / sum-of-squares are computed as matmuls against the
    # 128x128 block-diagonal ones matrix M (M[i,j] = 1 iff i//D == j//D),
    # which also broadcasts the statistics back across each segment's lanes.
    x = x_ref[...].astype(jnp.float32)
    m = m_ref[...]
    hp = jax.lax.Precision.HIGHEST  # full f32 matmul (0/1 RHS, exact reduce)

    mean = jnp.dot(x, m, preferred_element_type=jnp.float32,
                   precision=hp) * jnp.float32(1.0 / d)
    diff = x - mean
    ss = jnp.dot(diff * diff, m, preferred_element_type=jnp.float32,
                 precision=hp)
    std = jnp.sqrt(ss / jnp.float32(d - 1))            # unbiased, matches torch.std
    inv = pl.reciprocal(std + jnp.float32(eps), approx=False)

    a = a_ref[...].astype(jnp.float32)
    b = b_ref[...].astype(jnp.float32)
    o_ref[...] = (diff * (a * inv) + b).astype(o_ref.dtype)


# ---------------------------------------------------------------------------
# Wrappers
# ---------------------------------------------------------------------------

def _layer_norm_rows(x2, a2, b2, eps, capacity):
    rows, d = x2.shape
    itemsize = jnp.dtype(x2.dtype).itemsize
    tile, _, limit_cap = _choose_tile_rows(rows, d, itemsize, capacity)

    block_io = tile * d * itemsize
    f32_ws = 5 * tile * d * 4
    param_bytes = 2 * d * jnp.dtype(a2.dtype).itemsize
    footprint = 4 * block_io + f32_ws + 2 * param_bytes + (2 << 20)
    # If the degenerate very-wide-D floor makes footprint exceed the cap, the
    # compile fails loudly rather than silently spilling.
    vmem_limit = max(8 << 20, min(limit_cap, footprint))

    cost = pl.CostEstimate(
        flops=10 * rows * d,
        transcendentals=2 * rows,
        bytes_accessed=2 * rows * d * itemsize + param_bytes,
    )

    return pl.pallas_call(
        functools.partial(_layernorm_rows_kernel, eps=eps),
        out_shape=jax.ShapeDtypeStruct((rows, d), x2.dtype),
        grid_spec=pltpu.PrefetchScalarGridSpec(
            num_scalar_prefetch=0,
            grid=(pl.cdiv(rows, tile),),
            in_specs=[
                # If a v7x trace still shows exposed DMA, sweep
                # pipeline_mode=pl.Buffered(3) on this spec.
                pl.BlockSpec((tile, d), lambda i: (i, 0)),
                pl.BlockSpec((1, d), lambda i: (0, 0)),
                pl.BlockSpec((1, d), lambda i: (0, 0)),
            ],
            out_specs=pl.BlockSpec((tile, d), lambda i: (i, 0)),
        ),
        compiler_params=pltpu.CompilerParams(
            dimension_semantics=("parallel",),
            vmem_limit_bytes=int(vmem_limit),
        ),
        cost_estimate=cost,
    )(x2, a2, b2)


def _layer_norm_packed(x2, a, b, eps, d, capacity):
    rows = x2.shape[0]
    itemsize = jnp.dtype(x2.dtype).itemsize

    p = 128 // d                     # logical rows folded per lane-dense row
    width = 128                      # lane-dense: unmasked loads/stores
    rows_pad = _round_up(rows, p)
    if rows_pad != rows:
        x2 = jnp.pad(x2, ((0, rows_pad - rows), (0, 0)))
    xp = x2.reshape(rows_pad // p, width)
    prows = xp.shape[0]

    a_lane = jnp.tile(a.reshape(-1), p).reshape(1, width)
    b_lane = jnp.tile(b.reshape(-1), p).reshape(1, width)

    seg = jnp.arange(width, dtype=jnp.int32) // d
    m_sel = (seg[:, None] == seg[None, :]).astype(jnp.float32)   # (128, 128)

    tile, _, limit_cap = _choose_tile_rows(prows, width, itemsize, capacity)

    block_io = tile * width * itemsize
    f32_ws = 5 * tile * width * 4
    side_bytes = 2 * (2 * width * jnp.dtype(a_lane.dtype).itemsize
                      + width * width * 4)
    footprint = 4 * block_io + f32_ws + side_bytes + (2 << 20)
    vmem_limit = max(8 << 20, min(limit_cap, footprint))

    cost = pl.CostEstimate(
        flops=4 * prows * width * width + 10 * prows * width,
        transcendentals=2 * prows * width,
        bytes_accessed=2 * prows * width * itemsize + side_bytes,
    )

    out = pl.pallas_call(
        functools.partial(_layernorm_packed_kernel, eps=eps, d=d),
        out_shape=jax.ShapeDtypeStruct((prows, width), x2.dtype),
        grid_spec=pltpu.PrefetchScalarGridSpec(
            num_scalar_prefetch=0,
            grid=(pl.cdiv(prows, tile),),
            in_specs=[
                pl.BlockSpec((tile, width), lambda i: (i, 0)),
                pl.BlockSpec((1, width), lambda i: (0, 0)),
                pl.BlockSpec((1, width), lambda i: (0, 0)),
                pl.BlockSpec((width, width), lambda i: (0, 0)),
            ],
            out_specs=pl.BlockSpec((tile, width), lambda i: (i, 0)),
        ),
        compiler_params=pltpu.CompilerParams(
            dimension_semantics=("parallel",),
            vmem_limit_bytes=int(vmem_limit),
        ),
        cost_estimate=cost,
    )(xp, a_lane, b_lane, m_sel)

    return out.reshape(rows_pad, d)[:rows]


def layer_norm(x, a, b, eps=1e-7):
    """LayerNorm over the last axis of x. a, b have shape (dim,)."""
    orig_shape = x.shape
    d = int(orig_shape[-1])
    x2 = x.reshape(-1, d)
    capacity = _vmem_capacity_bytes()

    if d < 128 and 128 % d == 0:
        # Lane-sparse dims: fold 128/d rows into the lane axis (biggest lever
        # for small D: dense, unmasked stores instead of 75%-masked vst.msk).
        out = _layer_norm_packed(x2, a, b, eps, d, capacity)
    else:
        out = _layer_norm_rows(x2, a.reshape(1, d), b.reshape(1, d), eps, capacity)
    return out.reshape(orig_shape)


# ---------------------------------------------------------------------------
# Reference + demo
# ---------------------------------------------------------------------------

def _reference_layer_norm(x, a, b, eps=1e-7):
    x = x.astype(jnp.float32)
    mean = jnp.mean(x, axis=-1, keepdims=True)
    d = x.shape[-1]
    var = jnp.sum((x - mean) ** 2, axis=-1, keepdims=True) / (d - 1)
    std = jnp.sqrt(var)
    return a * (x - mean) / (std + eps) + b


if __name__ == "__main__":
    key = jax.random.PRNGKey(0)
    k1, k2 = jax.random.split(key)

    # Shapes implied by the module: LayerNorm(dim) applied over the last axis.
    batch, seq, hidden = 2, 8, 32
    x = jax.random.normal(k1, (batch, seq, hidden), dtype=jnp.float32)
    # Parameter init matching nn.Parameter(torch.ones(dim) / torch.zeros(dim)).
    a = jnp.ones((hidden,), dtype=jnp.float32)
    b = jnp.zeros((hidden,), dtype=jnp.float32)

    out = jax.block_until_ready(layer_norm(x, a, b, eps=1e-7))
    ref = _reference_layer_norm(x, a, b, eps=1e-7)
    assert out.shape == x.shape and out.dtype == x.dtype
    assert jnp.allclose(out, ref, atol=1e-5, rtol=1e-5), "packed-path mismatch"

    # Also exercise the wide-D streaming path (D >= 128).
    hidden2 = 256
    x2 = jax.random.normal(k2, (batch, seq, hidden2), dtype=jnp.float32)
    a2 = jnp.ones((hidden2,), dtype=jnp.float32)
    b2 = jnp.zeros((hidden2,), dtype=jnp.float32)
    out2 = jax.block_until_ready(layer_norm(x2, a2, b2, eps=1e-7))
    ref2 = _reference_layer_norm(x2, a2, b2, eps=1e-7)
    assert jnp.allclose(out2, ref2, atol=1e-5, rtol=1e-5), "rows-path mismatch"

    print("KERNEL_OK")
</pallas_src>

<mosaic_0001>
module attributes {stable_mosaic.version = 11 : i64} {
  func.func @_layernorm_packed_kernel(%arg0: i32, %arg1: memref<8x128xf32, #tpu.memory_space<vmem>>, %arg2: memref<1x128xf32, #tpu.memory_space<vmem>>, %arg3: memref<1x128xf32, #tpu.memory_space<vmem>>, %arg4: memref<128x128xf32, #tpu.memory_space<vmem>>, %arg5: memref<8x128xf32, #tpu.memory_space<vmem>>) attributes {dimension_semantics = [#tpu.dimension_semantics<parallel>], iteration_bounds = array<i64: 1>, scalar_prefetch = 0 : i64, scratch_operands = 0 : i64, tpu.core_type = #tpu.core_type<tc>, window_params = [{transform_indices = @transform_0, window_bounds = array<i64: 8, 128>}, {pipeline_mode = #tpu.pipeline_mode<synchronous>, transform_indices = @transform_1, window_bounds = array<i64: 1, 128>}, {pipeline_mode = #tpu.pipeline_mode<synchronous>, transform_indices = @transform_2, window_bounds = array<i64: 1, 128>}, {pipeline_mode = #tpu.pipeline_mode<synchronous>, transform_indices = @transform_3, window_bounds = array<i64: 128, 128>}, {transform_indices = @transform_4, window_bounds = array<i64: 8, 128>}]} {
    %c0 = arith.constant 0 : index
    %c0_0 = arith.constant 0 : index
    %0 = vector.load %arg1[%c0, %c0_0] : memref<8x128xf32, #tpu.memory_space<vmem>>, vector<8x128xf32>
    %c0_1 = arith.constant 0 : index
    %c0_2 = arith.constant 0 : index
    %1 = vector.load %arg4[%c0_1, %c0_2] : memref<128x128xf32, #tpu.memory_space<vmem>>, vector<128x128xf32>
    %cst = arith.constant dense<0.000000e+00> : vector<8x128xf32>
    %2 = tpu.matmul %0, %1, %cst {dimension_numbers = #tpu.dot_dimension_numbers<[1], [0], [0], [1], [0, 0, 1, 1], [], []>, precision = #tpu.contract_precision<fp32>} : vector<8x128xf32>, vector<128x128xf32>, vector<8x128xf32> -> vector<8x128xf32>
    %cst_3 = arith.constant 3.125000e-02 : f32
    %3 = vector.broadcast %cst_3 : f32 to vector<8x128xf32>
    %4 = arith.mulf %2, %3 : vector<8x128xf32>
    %5 = arith.subf %0, %4 : vector<8x128xf32>
    %6 = arith.mulf %5, %5 : vector<8x128xf32>
    %cst_4 = arith.constant dense<0.000000e+00> : vector<8x128xf32>
    %7 = tpu.matmul %6, %1, %cst_4 {dimension_numbers = #tpu.dot_dimension_numbers<[1], [0], [0], [1], [0, 0, 1, 1], [], []>, precision = #tpu.contract_precision<fp32>} : vector<8x128xf32>, vector<128x128xf32>, vector<8x128xf32> -> vector<8x128xf32>
    %cst_5 = arith.constant 3.100000e+01 : f32
    %8 = vector.broadcast %cst_5 : f32 to vector<8x128xf32>
    %9 = arith.divf %7, %8 : vector<8x128xf32>
    %10 = math.sqrt %9 : vector<8x128xf32>
    %cst_6 = arith.constant 1.000000e-07 : f32
    %11 = vector.broadcast %cst_6 : f32 to vector<8x128xf32>
    %12 = arith.addf %10, %11 : vector<8x128xf32>
    %13 = tpu.reciprocal %12 : vector<8x128xf32> -> vector<8x128xf32>
    %c0_7 = arith.constant 0 : index
    %c0_8 = arith.constant 0 : index
    %14 = vector.load %arg2[%c0_7, %c0_8] : memref<1x128xf32, #tpu.memory_space<vmem>>, vector<1x128xf32>
    %c0_9 = arith.constant 0 : index
    %c0_10 = arith.constant 0 : index
    %15 = vector.load %arg3[%c0_9, %c0_10] : memref<1x128xf32, #tpu.memory_space<vmem>>, vector<1x128xf32>
    %16 = vector.broadcast %14 : vector<1x128xf32> to vector<8x128xf32>
    %17 = arith.mulf %16, %13 : vector<8x128xf32>
    %18 = arith.mulf %5, %17 : vector<8x128xf32>
    %19 = vector.broadcast %15 : vector<1x128xf32> to vector<8x128xf32>
    %20 = arith.addf %18, %19 : vector<8x128xf32>
    %c0_11 = arith.constant 0 : index
    %c0_12 = arith.constant 0 : index
    %21 = vector.load %arg5[%c0_11, %c0_12] : memref<8x128xf32, #tpu.memory_space<vmem>>, vector<8x128xf32>
    tpu.vector_store %arg5[%c0_11, %c0_12], %20 {strides = array<i32>} : memref<8x128xf32, #tpu.memory_space<vmem>>, vector<8x128xf32>,
    return
  }
  func.func @transform_0(%arg0: i32) -> (i32, i32) {
    %c0_i32 = arith.constant 0 : i32
    %c0_i32_0 = arith.constant 0 : i32
    return %arg0, %c0_i32 : i32, i32
  }
  func.func @transform_1(%arg0: i32) -> (i32, i32) {
    %c0_i32 = arith.constant 0 : i32
    %c0_i32_0 = arith.constant 0 : i32
    %c0_i32_1 = arith.constant 0 : i32
    return %c0_i32, %c0_i32_0 : i32, i32
  }
  func.func @transform_2(%arg0: i32) -> (i32, i32) {
    %c0_i32 = arith.constant 0 : i32
    %c0_i32_0 = arith.constant 0 : i32
    %c0_i32_1 = arith.constant 0 : i32
    return %c0_i32, %c0_i32_0 : i32, i32
  }
  func.func @transform_3(%arg0: i32) -> (i32, i32) {
    %c0_i32 = arith.constant 0 : i32
    %c0_i32_0 = arith.constant 0 : i32
    %c0_i32_1 = arith.constant 0 : i32
    return %c0_i32, %c0_i32_0 : i32, i32
  }
  func.func @transform_4(%arg0: i32) -> (i32, i32) {
    %c0_i32 = arith.constant 0 : i32
    %c0_i32_0 = arith.constant 0 : i32
    return %arg0, %c0_i32 : i32, i32
  }
}

</mosaic_0001>

<llo_original>
// kernel: tpu_custom_call.1
$region0: #{tpu_custom_call.1}
  #allocation0 [shape = 'u32[]', space=smem, size = 0x4, offset = 0x4, fixed_abs, tag = 'smem constant byte address 0x4 - core index']
  #allocation1 [shape = 'u32[72,128]{1,0:T(1,128)}', space=vmem, size = 0x9000, scoped, tag = 'internal scratch']
  %s0 = inlined_call_operand.hbm [shape: f32[4,128], index: 0, kind: input, shape index: {}]
  %s1 = inlined_call_operand.hbm [shape: f32[1,128], index: 1, kind: input, shape index: {}]
  %s2 = inlined_call_operand.vmem [shape: f32[1,128], index: 2, kind: input, shape index: {}]
  %s3 = inlined_call_operand.hbm [shape: f32[128,128], index: 3, kind: input, shape index: {}]
  %s4 = inlined_call_operand.hbm [shape: f32[4,128], index: 4, kind: output, shape index: {}]
  %s5 = sld [smem:[#allocation0]]
  $region38: #{tpu_custom_call.1} parent=0
    _
  %s7 = ssub.s32 1, %s5
  %s8 = scalar_select 0, %s7, %s5
  $region1: #{tpu_custom_call.1} parent=0
    #allocation2 [shape = 'u8[4096]{0}', space=vmem, size = 0x1000, scoped, tag = 'input window, operand 0, single buffered']
    #allocation3 [shape = 's32[1]{0}', space=sflag, size = 0x4, scoped, tag = 'scoped memory for tpu_custom_call.1']
    #allocation4 [shape = 's32[1]{0}', space=sflag, size = 0x4, scoped, tag = 'scoped memory for tpu_custom_call.1']
    #allocation5 [shape = 'u8[512]{0}', space=vmem, size = 0x400, scoped, tag = 'input window, operand 1, single buffered']
    #allocation6 [shape = 's32[1]{0}', space=sflag, size = 0x4, scoped, tag = 'scoped memory for tpu_custom_call.1']
    #allocation7 [shape = 'u8[65536]{0}', space=vmem, size = 0x10000, scoped, tag = 'input window, operand 3, single buffered']
    #allocation8 [shape = 'u8[4096]{0}', space=vmem, size = 0x1000, scoped, tag = 'output window, operand 0, single buffered']
    %9 = vsyncpa [#allocation3], 0
    %10 = vsyncpa [#allocation6], 0
    %11 = vsyncpa [#allocation4], 0
    // Predicated region
    $region2: #{tpu_custom_call.1} parent=1 // pred_check
      _
    $region3: #{tpu_custom_call.1} parent=1 // pred_check_branch
      %13 = sbr.rel (0) target = $region5
    $region4: #{tpu_custom_call.1} parent=1 // pred_region
      %15 = vsyncadd [#allocation3], 64
      %s16 = sshll.u32 %s0, 4
      %s17 = int_to_ptr.hbm [resolvable:$true] %s16
      %s18 = sshll.u32 [#allocation2], 4
      %s19 = int_to_ptr.vmem [resolvable:$true] %s18
      %24 = dma.hbm_to_vmem [thread:$0]  %s17, 64, %s19, [#allocation3], 64, 64, 4
    $region5: #{tpu_custom_call.1} parent=1 // pred_fallthru
      _
    // Predicated region
    $region6: #{tpu_custom_call.1} parent=1 // pred_check
      _
    $region7: #{tpu_custom_call.1} parent=1 // pred_check_branch
      %26 = sbr.rel (0) target = $region9
    $region8: #{tpu_custom_call.1} parent=1 // pred_region
      %28 = vsyncadd [#allocation6], 0
      %s30 = sshll.u32 %s1, 4
      %s31 = int_to_ptr.hbm [resolvable:$true] %s30
      %s32 = sshll.u32 [#allocation5], 4
      %s33 = int_to_ptr.vmem [resolvable:$true] %s32
      %35 = dma.hbm_to_vmem [thread:$0]  %s31, 16, %s33, [#allocation6]
    $region9: #{tpu_custom_call.1} parent=1 // pred_fallthru
      _
    // Predicated region
    $region10: #{tpu_custom_call.1} parent=1 // pred_check
      _
    $region11: #{tpu_custom_call.1} parent=1 // pred_check_branch
      %37 = sbr.rel (0) target = $region13
    $region12: #{tpu_custom_call.1} parent=1 // pred_region
      _
    $region13: #{tpu_custom_call.1} parent=1 // pred_fallthru
      _
    // Predicated region
    $region14: #{tpu_custom_call.1} parent=1 // pred_check
      _
    $region15: #{tpu_custom_call.1} parent=1 // pred_check_branch
      %39 = sbr.rel (0) target = $region17
    $region16: #{tpu_custom_call.1} parent=1 // pred_region
      %41 = vsyncadd [#allocation6], 0
      %s42 = sshll.u32 %s3, 4
      %s43 = int_to_ptr.hbm [resolvable:$true] %s42
      %s44 = sshll.u32 [#allocation7], 4
      %s45 = int_to_ptr.vmem [resolvable:$true] %s44
      %50 = dma.hbm_to_vmem [thread:$0]  %s43, 2048, %s45, [#allocation6], 128, 128, 8
    $region17: #{tpu_custom_call.1} parent=1 // pred_fallthru
      _
    // Predicated region
    $region18: #{tpu_custom_call.1} parent=1 // pred_check
      _
    $region19: #{tpu_custom_call.1} parent=1 // pred_check_branch
      %52 = sbr.rel (0) target = $region21
    $region20: #{tpu_custom_call.1} parent=1 // pred_region
      %54 = dma.done [#allocation3], 128
    $region21: #{tpu_custom_call.1} parent=1 // pred_fallthru
      _
    // Predicated region
    $region22: #{tpu_custom_call.1} parent=1 // pred_check
      _
    $region23: #{tpu_custom_call.1} parent=1 // pred_check_branch
      %56 = sbr.rel (0) target = $region25
    $region24: #{tpu_custom_call.1} parent=1 // pred_region
      %58 = dma.done [#allocation6], 16
    $region25: #{tpu_custom_call.1} parent=1 // pred_fallthru
      _
    // Predicated region
    $region26: #{tpu_custom_call.1} parent=1 // pred_check
      _
    $region27: #{tpu_custom_call.1} parent=1 // pred_check_branch
      %60 = sbr.rel (0) target = $region29
    $region28: #{tpu_custom_call.1} parent=1 // pred_region
      %62 = dma.done [#allocation6], 2048
    $region29: #{tpu_custom_call.1} parent=1 // pred_fallthru
      _
    %v63 = vld [vmem:[#allocation2] sm:$0xff]
    %v64 = vld [vmem:[#allocation7] sm:$0xff]
    %v65 = vld [vmem:[#allocation7 + $0x8] sm:$0xff]
    %v66 = vld [vmem:[#allocation7 + $0x10] sm:$0xff]
    %v67 = vld [vmem:[#allocation7 + $0x18] sm:$0xff]
    %v68 = vld [vmem:[#allocation7 + $0x20] sm:$0xff]
    %v69 = vld [vmem:[#allocation7 + $0x28] sm:$0xff]
    %v70 = vld [vmem:[#allocation7 + $0x30] sm:$0xff]
    %v71 = vld [vmem:[#allocation7 + $0x38] sm:$0xff]
    %v72 = vld [vmem:[#allocation7 + $0x40] sm:$0xff]
    %v73 = vld [vmem:[#allocation7 + $0x48] sm:$0xff]
    %v74 = vld [vmem:[#allocation7 + $0x50] sm:$0xff]
    %v75 = vld [vmem:[#allocation7 + $0x58] sm:$0xff]
    %v76 = vld [vmem:[#allocation7 + $0x60] sm:$0xff]
    %v77 = vld [vmem:[#allocation7 + $0x68] sm:$0xff]
    %v78 = vld [vmem:[#allocation7 + $0x70] sm:$0xff]
    %v79 = vld [vmem:[#allocation7 + $0x78] sm:$0xff]
    %v80 = vand.u32 %v79, 4294901760
    %81 = vmatpush.msra.mxu0 %v80
    %v82 = vand.u32 %v78, 4294901760
    %83 = vmatpush.msra.mxu0 %v82
    %v84 = vand.u32 %v77, 4294901760
    %85 = vmatpush.msra.mxu0 %v84
    %v86 = vand.u32 %v76, 4294901760
    %87 = vmatpush.msra.mxu0 %v86
    %v88 = vand.u32 %v75, 4294901760
    %89 = vmatpush.msra.mxu0 %v88
    %v90 = vand.u32 %v74, 4294901760
    %91 = vmatpush.msra.mxu0 %v90
    %v92 = vand.u32 %v73, 4294901760
    %93 = vmatpush.msra.mxu0 %v92
    %v94 = vand.u32 %v72, 4294901760
    %95 = vmatpush.msra.mxu0 %v94
    %v96 = vand.u32 %v71, 4294901760
    %97 = vmatpush.msra.mxu0 %v96
    %v98 = vand.u32 %v70, 4294901760
    %99 = vmatpush.msra.mxu0 %v98
    %v100 = vand.u32 %v69, 4294901760
    %101 = vmatpush.msra.mxu0 %v100
    %v102 = vand.u32 %v68, 4294901760
    %103 = vmatpush.msra.mxu0 %v102
    %v104 = vand.u32 %v67, 4294901760
    %105 = vmatpush.msra.mxu0 %v104
    %v106 = vand.u32 %v66, 4294901760
    %107 = vmatpush.msra.mxu0 %v106
    %v108 = vand.u32 %v65, 4294901760
    %109 = vmatpush.msra.mxu0 %v108
    %v110 = vand.u32 %v64, 4294901760
    %111 = vmatpush.msra.mxu0 %v110
    %v112 = vand.u32 %v63, 4294901760
    %v113 = vsub.f32 %v63, %v112
    %v114 = vand.u32 %v113, 4294901760
    %v115 = vsub.f32 %v113, %v114
    %v116 = vand.u32 %v115, 4294901760
    %117 = vmatmul.f32.gmra.mxu0 %v116
    %v118 = vpop.f32.mrf.mxu0
    %v119 = vadd.f32 0.0, %v118
    %120 = vdwg.mxu0
    %v121 = vand.u32 %v79, 4294901760
    %v122 = vsub.f32 %v79, %v121
    %v123 = vand.u32 %v122, 4294901760
    %v124 = vsub.f32 %v122, %v123
    %v125 = vand.u32 %v124, 4294901760
    %126 = vmatpush.msra.mxu0 %v125
    %v127 = vand.u32 %v78, 4294901760
    %v128 = vsub.f32 %v78, %v127
    %v129 = vand.u32 %v128, 4294901760
    %v130 = vsub.f32 %v128, %v129
    %v131 = vand.u32 %v130, 4294901760
    %132 = vmatpush.msra.mxu0 %v131
    %v133 = vand.u32 %v77, 4294901760
    %v134 = vsub.f32 %v77, %v133
    %v135 = vand.u32 %v134, 4294901760
    %v136 = vsub.f32 %v134, %v135
    %v137 = vand.u32 %v136, 4294901760
    %138 = vmatpush.msra.mxu0 %v137
    %v139 = vand.u32 %v76, 4294901760
    %v140 = vsub.f32 %v76, %v139
    %v141 = vand.u32 %v140, 4294901760
    %v142 = vsub.f32 %v140, %v141
    %v143 = vand.u32 %v142, 4294901760
    %144 = vmatpush.msra.mxu0 %v143
    %v145 = vand.u32 %v75, 4294901760
    %v146 = vsub.f32 %v75, %v145
    %v147 = vand.u32 %v146, 4294901760
    %v148 = vsub.f32 %v146, %v147
    %v149 = vand.u32 %v148, 4294901760
    %150 = vmatpush.msra.mxu0 %v149
    %v151 = vand.u32 %v74, 4294901760
    %v152 = vsub.f32 %v74, %v151
    %v153 = vand.u32 %v152, 4294901760
    %v154 = vsub.f32 %v152, %v153
    %v155 = vand.u32 %v154, 4294901760
    %156 = vmatpush.msra.mxu0 %v155
    %v157 = vand.u32 %v73, 4294901760
    %v158 = vsub.f32 %v73, %v157
    %v159 = vand.u32 %v158, 4294901760
    %v160 = vsub.f32 %v158, %v159
    %v161 = vand.u32 %v160, 4294901760
    %162 = vmatpush.msra.mxu0 %v161
    %v163 = vand.u32 %v72, 4294901760
    %v164 = vsub.f32 %v72, %v163
    %v165 = vand.u32 %v164, 4294901760
    %v166 = vsub.f32 %v164, %v165
    %v167 = vand.u32 %v166, 4294901760
    %168 = vmatpush.msra.mxu0 %v167
    %v169 = vand.u32 %v71, 4294901760
    %v170 = vsub.f32 %v71, %v169
    %v171 = vand.u32 %v170, 4294901760
    %v172 = vsub.f32 %v170, %v171
    %v173 = vand.u32 %v172, 4294901760
    %174 = vmatpush.msra.mxu0 %v173
    %v175 = vand.u32 %v70, 4294901760
    %v176 = vsub.f32 %v70, %v175
    %v177 = vand.u32 %v176, 4294901760
    %v178 = vsub.f32 %v176, %v177
    %v179 = vand.u32 %v178, 4294901760
    %180 = vmatpush.msra.mxu0 %v179
    %v181 = vand.u32 %v69, 4294901760
    %v182 = vsub.f32 %v69, %v181
    %v183 = vand.u32 %v182, 4294901760
    %v184 = vsub.f32 %v182, %v183
    %v185 = vand.u32 %v184, 4294901760
    %186 = vmatpush.msra.mxu0 %v185
    %v187 = vand.u32 %v68, 4294901760
    %v188 = vsub.f32 %v68, %v187
    %v189 = vand.u32 %v188, 4294901760
    %v190 = vsub.f32 %v188, %v189
    %v191 = vand.u32 %v190, 4294901760
    %192 = vmatpush.msra.mxu0 %v191
    %v193 = vand.u32 %v67, 4294901760
    %v194 = vsub.f32 %v67, %v193
    %v195 = vand.u32 %v194, 4294901760
    %v196 = vsub.f32 %v194, %v195
    %v197 = vand.u32 %v196, 4294901760
    %198 = vmatpush.msra.mxu0 %v197
    %v199 = vand.u32 %v66, 4294901760
    %v200 = vsub.f32 %v66, %v199
    %v201 = vand.u32 %v200, 4294901760
    %v202 = vsub.f32 %v200, %v201
    %v203 = vand.u32 %v202, 4294901760
    %204 = vmatpush.msra.mxu0 %v203
    %v205 = vand.u32 %v65, 4294901760
    %v206 = vsub.f32 %v65, %v205
    %v207 = vand.u32 %v206, 4294901760
    %v208 = vsub.f32 %v206, %v207
    %v209 = vand.u32 %v208, 4294901760
    %210 = vmatpush.msra.mxu0 %v209
    %v211 = vand.u32 %v64, 4294901760
    %v212 = vsub.f32 %v64, %v211
    %v213 = vand.u32 %v212, 4294901760
    %v214 = vsub.f32 %v212, %v213
    %v215 = vand.u32 %v214, 4294901760
    %216 = vmatpush.msra.mxu0 %v215
    %v217 = vand.u32 %v63, 4294901760
    %218 = vmatmul.f32.gmra.mxu0 %v217
    %v219 = vpop.f32.mrf.mxu0
    %v220 = vadd.f32 %v119, %v219
    %221 = vdwg.mxu0
    %v222 = vand.u32 %v79, 4294901760
    %v223 = vsub.f32 %v79, %v222
    %224 = vmatpush.msra.mxu0 %v223
    %v225 = vand.u32 %v78, 4294901760
    %v226 = vsub.f32 %v78, %v225
    %227 = vmatpush.msra.mxu0 %v226
    %v228 = vand.u32 %v77, 4294901760
    %v229 = vsub.f32 %v77, %v228
    %230 = vmatpush.msra.mxu0 %v229
    %v231 = vand.u32 %v76, 4294901760
    %v232 = vsub.f32 %v76, %v231
    %233 = vmatpush.msra.mxu0 %v232
    %v234 = vand.u32 %v75, 4294901760
    %v235 = vsub.f32 %v75, %v234
    %236 = vmatpush.msra.mxu0 %v235
    %v237 = vand.u32 %v74, 4294901760
    %v238 = vsub.f32 %v74, %v237
    %239 = vmatpush.msra.mxu0 %v238
    %v240 = vand.u32 %v73, 4294901760
    %v241 = vsub.f32 %v73, %v240
    %242 = vmatpush.msra.mxu0 %v241
    %v243 = vand.u32 %v72, 4294901760
    %v244 = vsub.f32 %v72, %v243
    %245 = vmatpush.msra.mxu0 %v244
    %v246 = vand.u32 %v71, 4294901760
    %v247 = vsub.f32 %v71, %v246
    %248 = vmatpush.msra.mxu0 %v247
    %v249 = vand.u32 %v70, 4294901760
    %v250 = vsub.f32 %v70, %v249
    %251 = vmatpush.msra.mxu0 %v250
    %v252 = vand.u32 %v69, 4294901760
    %v253 = vsub.f32 %v69, %v252
    %254 = vmatpush.msra.mxu0 %v253
    %v255 = vand.u32 %v68, 4294901760
    %v256 = vsub.f32 %v68, %v255
    %257 = vmatpush.msra.mxu0 %v256
    %v258 = vand.u32 %v67, 4294901760
    %v259 = vsub.f32 %v67, %v258
    %260 = vmatpush.msra.mxu0 %v259
    %v261 = vand.u32 %v66, 4294901760
    %v262 = vsub.f32 %v66, %v261
    %263 = vmatpush.msra.mxu0 %v262
    %v264 = vand.u32 %v65, 4294901760
    %v265 = vsub.f32 %v65, %v264
    %266 = vmatpush.msra.mxu0 %v265
    %v267 = vand.u32 %v64, 4294901760
    %v268 = vsub.f32 %v64, %v267
    %269 = vmatpush.msra.mxu0 %v268
    %v270 = vand.u32 %v63, 4294901760
    %v271 = vsub.f32 %v63, %v270
    %272 = vmatmul.f32.gmra.mxu0 %v271
    %v273 = vpop.f32.mrf.mxu0
    %v274 = vadd.f32 %v220, %v273
    %275 = vdwg.mxu0
    %v276 = vand.u32 %v79, 4294901760
    %277 = vmatpush.msra.mxu0 %v276
    %v278 = vand.u32 %v78, 4294901760
    %279 = vmatpush.msra.mxu0 %v278
    %v280 = vand.u32 %v77, 4294901760
    %281 = vmatpush.msra.mxu0 %v280
    %v282 = vand.u32 %v76, 4294901760
    %283 = vmatpush.msra.mxu0 %v282
    %v284 = vand.u32 %v75, 4294901760
    %285 = vmatpush.msra.mxu0 %v284
    %v286 = vand.u32 %v74, 4294901760
    %287 = vmatpush.msra.mxu0 %v286
    %v288 = vand.u32 %v73, 4294901760
    %289 = vmatpush.msra.mxu0 %v288
    %v290 = vand.u32 %v72, 4294901760
    %291 = vmatpush.msra.mxu0 %v290
    %v292 = vand.u32 %v71, 4294901760
    %293 = vmatpush.msra.mxu0 %v292
    %v294 = vand.u32 %v70, 4294901760
    %295 = vmatpush.msra.mxu0 %v294
    %v296 = vand.u32 %v69, 4294901760
    %297 = vmatpush.msra.mxu0 %v296
    %v298 = vand.u32 %v68, 4294901760
    %299 = vmatpush.msra.mxu0 %v298
    %v300 = vand.u32 %v67, 4294901760
    %301 = vmatpush.msra.mxu0 %v300
    %v302 = vand.u32 %v66, 4294901760
    %303 = vmatpush.msra.mxu0 %v302
    %v304 = vand.u32 %v65, 4294901760
    %305 = vmatpush.msra.mxu0 %v304
    %v306 = vand.u32 %v64, 4294901760
    %307 = vmatpush.msra.mxu0 %v306
    %v308 = vand.u32 %v63, 4294901760
    %v309 = vsub.f32 %v63, %v308
    %v310 = vand.u32 %v309, 4294901760
    %311 = vmatmul.f32.gmra.mxu0 %v310
    %v312 = vpop.f32.mrf.mxu0
    %v313 = vadd.f32 %v274, %v312
    %314 = vdwg.mxu0
    %v315 = vand.u32 %v79, 4294901760
    %v316 = vsub.f32 %v79, %v315
    %v317 = vand.u32 %v316, 4294901760
    %318 = vmatpush.msra.mxu0 %v317
    %v319 = vand.u32 %v78, 4294901760
    %v320 = vsub.f32 %v78, %v319
    %v321 = vand.u32 %v320, 4294901760
    %322 = vmatpush.msra.mxu0 %v321
    %v323 = vand.u32 %v77, 4294901760
    %v324 = vsub.f32 %v77, %v323
    %v325 = vand.u32 %v324, 4294901760
    %326 = vmatpush.msra.mxu0 %v325
    %v327 = vand.u32 %v76, 4294901760
    %v328 = vsub.f32 %v76, %v327
    %v329 = vand.u32 %v328, 4294901760
    %330 = vmatpush.msra.mxu0 %v329
    %v331 = vand.u32 %v75, 4294901760
    %v332 = vsub.f32 %v75, %v331
    %v333 = vand.u32 %v332, 4294901760
    %334 = vmatpush.msra.mxu0 %v333
    %v335 = vand.u32 %v74, 4294901760
    %v336 = vsub.f32 %v74, %v335
    %v337 = vand.u32 %v336, 4294901760
    %338 = vmatpush.msra.mxu0 %v337
    %v339 = vand.u32 %v73, 4294901760
    %v340 = vsub.f32 %v73, %v339
    %v341 = vand.u32 %v340, 4294901760
    %342 = vmatpush.msra.mxu0 %v341
    %v343 = vand.u32 %v72, 4294901760
    %v344 = vsub.f32 %v72, %v343
    %v345 = vand.u32 %v344, 4294901760
    %346 = vmatpush.msra.mxu0 %v345
    %v347 = vand.u32 %v71, 4294901760
    %v348 = vsub.f32 %v71, %v347
    %v349 = vand.u32 %v348, 4294901760
    %350 = vmatpush.msra.mxu0 %v349
    %v351 = vand.u32 %v70, 4294901760
    %v352 = vsub.f32 %v70, %v351
    %v353 = vand.u32 %v352, 4294901760
    %354 = vmatpush.msra.mxu0 %v353
    %v355 = vand.u32 %v69, 4294901760
    %v356 = vsub.f32 %v69, %v355
    %v357 = vand.u32 %v356, 4294901760
    %358 = vmatpush.msra.mxu0 %v357
    %v359 = vand.u32 %v68, 4294901760
    %v360 = vsub.f32 %v68, %v359
    %v361 = vand.u32 %v360, 4294901760
    %362 = vmatpush.msra.mxu0 %v361
    %v363 = vand.u32 %v67, 4294901760
    %v364 = vsub.f32 %v67, %v363
    %v365 = vand.u32 %v364, 4294901760
    %366 = vmatpush.msra.mxu0 %v365
    %v367 = vand.u32 %v66, 4294901760
    %v368 = vsub.f32 %v66, %v367
    %v369 = vand.u32 %v368, 4294901760
    %370 = vmatpush.msra.mxu0 %v369
    %v371 = vand.u32 %v65, 4294901760
    %v372 = vsub.f32 %v65, %v371
    %v373 = vand.u32 %v372, 4294901760
    %374 = vmatpush.msra.mxu0 %v373
    %v375 = vand.u32 %v64, 4294901760
    %v376 = vsub.f32 %v64, %v375
    %v377 = vand.u32 %v376, 4294901760
    %378 = vmatpush.msra.mxu0 %v377
    %v379 = vand.u32 %v63, 4294901760
    %380 = vmatmul.f32.gmra.mxu0 %v379
    %v381 = vpop.f32.mrf.mxu0
    %v382 = vadd.f32 %v313, %v381
    %383 = vdwg.mxu0
    %v384 = vand.u32 %v79, 4294901760
    %385 = vmatpush.msra.mxu0 %v384
    %v386 = vand.u32 %v78, 4294901760
    %387 = vmatpush.msra.mxu0 %v386
    %v388 = vand.u32 %v77, 4294901760
    %389 = vmatpush.msra.mxu0 %v388
    %v390 = vand.u32 %v76, 4294901760
    %391 = vmatpush.msra.mxu0 %v390
    %v392 = vand.u32 %v75, 4294901760
    %393 = vmatpush.msra.mxu0 %v392
    %v394 = vand.u32 %v74, 4294901760
    %395 = vmatpush.msra.mxu0 %v394
    %v396 = vand.u32 %v73, 4294901760
    %397 = vmatpush.msra.mxu0 %v396
    %v398 = vand.u32 %v72, 4294901760
    %399 = vmatpush.msra.mxu0 %v398
    %v400 = vand.u32 %v71, 4294901760
    %401 = vmatpush.msra.mxu0 %v400
    %v402 = vand.u32 %v70, 4294901760
    %403 = vmatpush.msra.mxu0 %v402
    %v404 = vand.u32 %v69, 4294901760
    %405 = vmatpush.msra.mxu0 %v404
    %v406 = vand.u32 %v68, 4294901760
    %407 = vmatpush.msra.mxu0 %v406
    %v408 = vand.u32 %v67, 4294901760
    %409 = vmatpush.msra.mxu0 %v408
    %v410 = vand.u32 %v66, 4294901760
    %411 = vmatpush.msra.mxu0 %v410
    %v412 = vand.u32 %v65, 4294901760
    %413 = vmatpush.msra.mxu0 %v412
    %v414 = vand.u32 %v64, 4294901760
    %415 = vmatpush.msra.mxu0 %v414
    %v416 = vand.u32 %v63, 4294901760
    %417 = vmatmul.f32.gmra.mxu0 %v416
    %v418 = vpop.f32.mrf.mxu0
    %v419 = vadd.f32 %v382, %v418
    %420 = vdwg.mxu0
    %v421 = vmul.f32 %v419, 0.03125
    %v422 = vsub.f32 %v63, %v421
    %v423 = vmul.f32 %v422, %v422
    %v424 = vand.u32 %v79, 4294901760
    %425 = vmatpush.msra.mxu0 %v424
    %v426 = vand.u32 %v78, 4294901760
    %427 = vmatpush.msra.mxu0 %v426
    %v428 = vand.u32 %v77, 4294901760
    %429 = vmatpush.msra.mxu0 %v428
    %v430 = vand.u32 %v76, 4294901760
    %431 = vmatpush.msra.mxu0 %v430
    %v432 = vand.u32 %v75, 4294901760
    %433 = vmatpush.msra.mxu0 %v432
    %v434 = vand.u32 %v74, 4294901760
    %435 = vmatpush.msra.mxu0 %v434
    %v436 = vand.u32 %v73, 4294901760
    %437 = vmatpush.msra.mxu0 %v436
    %v438 = vand.u32 %v72, 4294901760
    %439 = vmatpush.msra.mxu0 %v438
    %v440 = vand.u32 %v71, 4294901760
    %441 = vmatpush.msra.mxu0 %v440
    %v442 = vand.u32 %v70, 4294901760
    %443 = vmatpush.msra.mxu0 %v442
    %v444 = vand.u32 %v69, 4294901760
    %445 = vmatpush.msra.mxu0 %v444
    %v446 = vand.u32 %v68, 4294901760
    %447 = vmatpush.msra.mxu0 %v446
    %v448 = vand.u32 %v67, 4294901760
    %449 = vmatpush.msra.mxu0 %v448
    %v450 = vand.u32 %v66, 4294901760
    %451 = vmatpush.msra.mxu0 %v450
    %v452 = vand.u32 %v65, 4294901760
    %453 = vmatpush.msra.mxu0 %v452
    %v454 = vand.u32 %v64, 4294901760
    %455 = vmatpush.msra.mxu0 %v454
    %v456 = vand.u32 %v423, 4294901760
    %v457 = vsub.f32 %v423, %v456
    %v458 = vand.u32 %v457, 4294901760
    %v459 = vsub.f32 %v457, %v458
    %v460 = vand.u32 %v459, 4294901760
    %461 = vmatmul.f32.gmra.mxu0 %v460
    %v462 = vpop.f32.mrf.mxu0
    %v463 = vadd.f32 0.0, %v462
    %464 = vdwg.mxu0
    %v465 = vand.u32 %v79, 4294901760
    %v466 = vsub.f32 %v79, %v465
    %v467 = vand.u32 %v466, 4294901760
    %v468 = vsub.f32 %v466, %v467
    %v469 = vand.u32 %v468, 4294901760
    %470 = vmatpush.msra.mxu0 %v469
    %v471 = vand.u32 %v78, 4294901760
    %v472 = vsub.f32 %v78, %v471
    %v473 = vand.u32 %v472, 4294901760
    %v474 = vsub.f32 %v472, %v473
    %v475 = vand.u32 %v474, 4294901760
    %476 = vmatpush.msra.mxu0 %v475
    %v477 = vand.u32 %v77, 4294901760
    %v478 = vsub.f32 %v77, %v477
    %v479 = vand.u32 %v478, 4294901760
    %v480 = vsub.f32 %v478, %v479
    %v481 = vand.u32 %v480, 4294901760
    %482 = vmatpush.msra.mxu0 %v481
    %v483 = vand.u32 %v76, 4294901760
    %v484 = vsub.f32 %v76, %v483
    %v485 = vand.u32 %v484, 4294901760
    %v486 = vsub.f32 %v484, %v485
    %v487 = vand.u32 %v486, 4294901760
    %488 = vmatpush.msra.mxu0 %v487
    %v489 = vand.u32 %v75, 4294901760
    %v490 = vsub.f32 %v75, %v489
    %v491 = vand.u32 %v490, 4294901760
    %v492 = vsub.f32 %v490, %v491
    %v493 = vand.u32 %v492, 4294901760
    %494 = vmatpush.msra.mxu0 %v493
    %v495 = vand.u32 %v74, 4294901760
    %v496 = vsub.f32 %v74, %v495
    %v497 = vand.u32 %v496, 4294901760
    %v498 = vsub.f32 %v496, %v497
    %v499 = vand.u32 %v498, 4294901760
    %500 = vmatpush.msra.mxu0 %v499
    %v501 = vand.u32 %v73, 4294901760
    %v502 = vsub.f32 %v73, %v501
    %v503 = vand.u32 %v502, 4294901760
    %v504 = vsub.f32 %v502, %v503
    %v505 = vand.u32 %v504, 4294901760
    %506 = vmatpush.msra.mxu0 %v505
    %v507 = vand.u32 %v72, 4294901760
    %v508 = vsub.f32 %v72, %v507
    %v509 = vand.u32 %v508, 4294901760
    %v510 = vsub.f32 %v508, %v509
    %v511 = vand.u32 %v510, 4294901760
    %512 = vmatpush.msra.mxu0 %v511
    %v513 = vand.u32 %v71, 4294901760
    %v514 = vsub.f32 %v71, %v513
    %v515 = vand.u32 %v514, 4294901760
    %v516 = vsub.f32 %v514, %v515
    %v517 = vand.u32 %v516, 4294901760
    %518 = vmatpush.msra.mxu0 %v517
    %v519 = vand.u32 %v70, 4294901760
    %v520 = vsub.f32 %v70, %v519
    %v521 = vand.u32 %v520, 4294901760
    %v522 = vsub.f32 %v520, %v521
    %v523 = vand.u32 %v522, 4294901760
    %524 = vmatpush.msra.mxu0 %v523
    %v525 = vand.u32 %v69, 4294901760
    %v526 = vsub.f32 %v69, %v525
    %v527 = vand.u32 %v526, 4294901760
    %v528 = vsub.f32 %v526, %v527
    %v529 = vand.u32 %v528, 4294901760
    %530 = vmatpush.msra.mxu0 %v529
    %v531 = vand.u32 %v68, 4294901760
    %v532 = vsub.f32 %v68, %v531
    %v533 = vand.u32 %v532, 4294901760
    %v534 = vsub.f32 %v532, %v533
    %v535 = vand.u32 %v534, 4294901760
    %536 = vmatpush.msra.mxu0 %v535
    %v537 = vand.u32 %v67, 4294901760
    %v538 = vsub.f32 %v67, %v537
    %v539 = vand.u32 %v538, 4294901760
    %v540 = vsub.f32 %v538, %v539
    %v541 = vand.u32 %v540, 4294901760
    %542 = vmatpush.msra.mxu0 %v541
    %v543 = vand.u32 %v66, 4294901760
    %v544 = vsub.f32 %v66, %v543
    %v545 = vand.u32 %v544, 4294901760
    %v546 = vsub.f32 %v544, %v545
    %v547 = vand.u32 %v546, 4294901760
    %548 = vmatpush.msra.mxu0 %v547
    %v549 = vand.u32 %v65, 4294901760
    %v550 = vsub.f32 %v65, %v549
    %v551 = vand.u32 %v550, 4294901760
    %v552 = vsub.f32 %v550, %v551
    %v553 = vand.u32 %v552, 4294901760
    %554 = vmatpush.msra.mxu0 %v553
    %v555 = vand.u32 %v64, 4294901760
    %v556 = vsub.f32 %v64, %v555
    %v557 = vand.u32 %v556, 4294901760
    %v558 = vsub.f32 %v556, %v557
    %v559 = vand.u32 %v558, 4294901760
    %560 = vmatpush.msra.mxu0 %v559
    %v561 = vand.u32 %v423, 4294901760
    %562 = vmatmul.f32.gmra.mxu0 %v561
    %v563 = vpop.f32.mrf.mxu0
    %v564 = vadd.f32 %v463, %v563
    %565 = vdwg.mxu0
    %v566 = vand.u32 %v79, 4294901760
    %v567 = vsub.f32 %v79, %v566
    %568 = vmatpush.msra.mxu0 %v567
    %v569 = vand.u32 %v78, 4294901760
    %v570 = vsub.f32 %v78, %v569
    %571 = vmatpush.msra.mxu0 %v570
    %v572 = vand.u32 %v77, 4294901760
    %v573 = vsub.f32 %v77, %v572
    %574 = vmatpush.msra.mxu0 %v573
    %v575 = vand.u32 %v76, 4294901760
    %v576 = vsub.f32 %v76, %v575
    %577 = vmatpush.msra.mxu0 %v576
    %v578 = vand.u32 %v75, 4294901760
    %v579 = vsub.f32 %v75, %v578
    %580 = vmatpush.msra.mxu0 %v579
    %v581 = vand.u32 %v74, 4294901760
    %v582 = vsub.f32 %v74, %v581
    %583 = vmatpush.msra.mxu0 %v582
    %v584 = vand.u32 %v73, 4294901760
    %v585 = vsub.f32 %v73, %v584
    %586 = vmatpush.msra.mxu0 %v585
    %v587 = vand.u32 %v72, 4294901760
    %v588 = vsub.f32 %v72, %v587
    %589 = vmatpush.msra.mxu0 %v588
    %v590 = vand.u32 %v71, 4294901760
    %v591 = vsub.f32 %v71, %v590
    %592 = vmatpush.msra.mxu0 %v591
    %v593 = vand.u32 %v70, 4294901760
    %v594 = vsub.f32 %v70, %v593
    %595 = vmatpush.msra.mxu0 %v594
    %v596 = vand.u32 %v69, 4294901760
    %v597 = vsub.f32 %v69, %v596
    %598 = vmatpush.msra.mxu0 %v597
    %v599 = vand.u32 %v68, 4294901760
    %v600 = vsub.f32 %v68, %v599
    %601 = vmatpush.msra.mxu0 %v600
    %v602 = vand.u32 %v67, 4294901760
    %v603 = vsub.f32 %v67, %v602
    %604 = vmatpush.msra.mxu0 %v603
    %v605 = vand.u32 %v66, 4294901760
    %v606 = vsub.f32 %v66, %v605
    %607 = vmatpush.msra.mxu0 %v606
    %v608 = vand.u32 %v65, 4294901760
    %v609 = vsub.f32 %v65, %v608
    %610 = vmatpush.msra.mxu0 %v609
    %v611 = vand.u32 %v64, 4294901760
    %v612 = vsub.f32 %v64, %v611
    %613 = vmatpush.msra.mxu0 %v612
    %v614 = vand.u32 %v423, 4294901760
    %v615 = vsub.f32 %v423, %v614
    %616 = vmatmul.f32.gmra.mxu0 %v615
    %v617 = vpop.f32.mrf.mxu0
    %v618 = vadd.f32 %v564, %v617
    %619 = vdwg.mxu0
    %v620 = vand.u32 %v79, 4294901760
    %621 = vmatpush.msra.mxu0 %v620
    %v622 = vand.u32 %v78, 4294901760
    %623 = vmatpush.msra.mxu0 %v622
    %v624 = vand.u32 %v77, 4294901760
    %625 = vmatpush.msra.mxu0 %v624
    %v626 = vand.u32 %v76, 4294901760
    %627 = vmatpush.msra.mxu0 %v626
    %v628 = vand.u32 %v75, 4294901760
    %629 = vmatpush.msra.mxu0 %v628
    %v630 = vand.u32 %v74, 4294901760
    %631 = vmatpush.msra.mxu0 %v630
    %v632 = vand.u32 %v73, 4294901760
    %633 = vmatpush.msra.mxu0 %v632
    %v634 = vand.u32 %v72, 4294901760
    %635 = vmatpush.msra.mxu0 %v634
    %v636 = vand.u32 %v71, 4294901760
    %637 = vmatpush.msra.mxu0 %v636
    %v638 = vand.u32 %v70, 4294901760
    %639 = vmatpush.msra.mxu0 %v638
    %v640 = vand.u32 %v69, 4294901760
    %641 = vmatpush.msra.mxu0 %v640
    %v642 = vand.u32 %v68, 4294901760
    %643 = vmatpush.msra.mxu0 %v642
    %v644 = vand.u32 %v67, 4294901760
    %645 = vmatpush.msra.mxu0 %v644
    %v646 = vand.u32 %v66, 4294901760
    %647 = vmatpush.msra.mxu0 %v646
    %v648 = vand.u32 %v65, 4294901760
    %649 = vmatpush.msra.mxu0 %v648
    %v650 = vand.u32 %v64, 4294901760
    %651 = vmatpush.msra.mxu0 %v650
    %v652 = vand.u32 %v423, 4294901760
    %v653 = vsub.f32 %v423, %v652
    %v654 = vand.u32 %v653, 4294901760
    %655 = vmatmul.f32.gmra.mxu0 %v654
    %v656 = vpop.f32.mrf.mxu0
    %v657 = vadd.f32 %v618, %v656
    %658 = vdwg.mxu0
    %v659 = vand.u32 %v79, 4294901760
    %v660 = vsub.f32 %v79, %v659
    %v661 = vand.u32 %v660, 4294901760
    %662 = vmatpush.msra.mxu0 %v661
    %v663 = vand.u32 %v78, 4294901760
    %v664 = vsub.f32 %v78, %v663
    %v665 = vand.u32 %v664, 4294901760
    %666 = vmatpush.msra.mxu0 %v665
    %v667 = vand.u32 %v77, 4294901760
    %v668 = vsub.f32 %v77, %v667
    %v669 = vand.u32 %v668, 4294901760
    %670 = vmatpush.msra.mxu0 %v669
    %v671 = vand.u32 %v76, 4294901760
    %v672 = vsub.f32 %v76, %v671
    %v673 = vand.u32 %v672, 4294901760
    %674 = vmatpush.msra.mxu0 %v673
    %v675 = vand.u32 %v75, 4294901760
    %v676 = vsub.f32 %v75, %v675
    %v677 = vand.u32 %v676, 4294901760
    %678 = vmatpush.msra.mxu0 %v677
    %v679 = vand.u32 %v74, 4294901760
    %v680 = vsub.f32 %v74, %v679
    %v681 = vand.u32 %v680, 4294901760
    %682 = vmatpush.msra.mxu0 %v681
    %v683 = vand.u32 %v73, 4294901760
    %v684 = vsub.f32 %v73, %v683
    %v685 = vand.u32 %v684, 4294901760
    %686 = vmatpush.msra.mxu0 %v685
    %v687 = vand.u32 %v72, 4294901760
    %v688 = vsub.f32 %v72, %v687
    %v689 = vand.u32 %v688, 4294901760
    %690 = vmatpush.msra.mxu0 %v689
    %v691 = vand.u32 %v71, 4294901760
    %v692 = vsub.f32 %v71, %v691
    %v693 = vand.u32 %v692, 4294901760
    %694 = vmatpush.msra.mxu0 %v693
    %v695 = vand.u32 %v70, 4294901760
    %v696 = vsub.f32 %v70, %v695
    %v697 = vand.u32 %v696, 4294901760
    %698 = vmatpush.msra.mxu0 %v697
    %v699 = vand.u32 %v69, 4294901760
    %v700 = vsub.f32 %v69, %v699
    %v701 = vand.u32 %v700, 4294901760
    %702 = vmatpush.msra.mxu0 %v701
    %v703 = vand.u32 %v68, 4294901760
    %v704 = vsub.f32 %v68, %v703
    %v705 = vand.u32 %v704, 4294901760
    %706 = vmatpush.msra.mxu0 %v705
    %v707 = vand.u32 %v67, 4294901760
    %v708 = vsub.f32 %v67, %v707
    %v709 = vand.u32 %v708, 4294901760
    %710 = vmatpush.msra.mxu0 %v709
    %v711 = vand.u32 %v66, 4294901760
    %v712 = vsub.f32 %v66, %v711
    %v713 = vand.u32 %v712, 4294901760
    %714 = vmatpush.msra.mxu0 %v713
    %v715 = vand.u32 %v65, 4294901760
    %v716 = vsub.f32 %v65, %v715
    %v717 = vand.u32 %v716, 4294901760
    %718 = vmatpush.msra.mxu0 %v717
    %v719 = vand.u32 %v64, 4294901760
    %v720 = vsub.f32 %v64, %v719
    %v721 = vand.u32 %v720, 4294901760
    %722 = vmatpush.msra.mxu0 %v721
    %v723 = vand.u32 %v423, 4294901760
    %724 = vmatmul.f32.gmra.mxu0 %v723
    %v725 = vpop.f32.mrf.mxu0
    %v726 = vadd.f32 %v657, %v725
    %727 = vdwg.mxu0
    %v728 = vand.u32 %v79, 4294901760
    %729 = vmatpush.msra.mxu0 %v728
    %v730 = vand.u32 %v78, 4294901760
    %731 = vmatpush.msra.mxu0 %v730
    %v732 = vand.u32 %v77, 4294901760
    %733 = vmatpush.msra.mxu0 %v732
    %v734 = vand.u32 %v76, 4294901760
    %735 = vmatpush.msra.mxu0 %v734
    %v736 = vand.u32 %v75, 4294901760
    %737 = vmatpush.msra.mxu0 %v736
    %v738 = vand.u32 %v74, 4294901760
    %739 = vmatpush.msra.mxu0 %v738
    %v740 = vand.u32 %v73, 4294901760
    %741 = vmatpush.msra.mxu0 %v740
    %v742 = vand.u32 %v72, 4294901760
    %743 = vmatpush.msra.mxu0 %v742
    %v744 = vand.u32 %v71, 4294901760
    %745 = vmatpush.msra.mxu0 %v744
    %v746 = vand.u32 %v70, 4294901760
    %747 = vmatpush.msra.mxu0 %v746
    %v748 = vand.u32 %v69, 4294901760
    %749 = vmatpush.msra.mxu0 %v748
    %v750 = vand.u32 %v68, 4294901760
    %751 = vmatpush.msra.mxu0 %v750
    %v752 = vand.u32 %v67, 4294901760
    %753 = vmatpush.msra.mxu0 %v752
    %v754 = vand.u32 %v66, 4294901760
    %755 = vmatpush.msra.mxu0 %v754
    %v756 = vand.u32 %v65, 4294901760
    %757 = vmatpush.msra.mxu0 %v756
    %v758 = vand.u32 %v64, 4294901760
    %759 = vmatpush.msra.mxu0 %v758
    %v760 = vand.u32 %v423, 4294901760
    %761 = vmatmul.f32.gmra.mxu0 %v760
    %v762 = vpop.f32.mrf.mxu0
    %v763 = vadd.f32 %v726, %v762
    %764 = vdwg.mxu0
    %v765 = vrcp.pop 31.0
    %v766 = vmul.f32 31.0, %v765
    %v767 = vsub.f32 1.0, %v766
    %v768 = vmul.f32 %v765, %v767
    %v769 = vadd.f32 %v765, %v768
    %vm770 = vweird.f32 %v765
    %v771 = vsel %vm770, %v765, %v769
    %v772 = vmul.f32 %v763, %v771
    %v773 = vrsqrt.pop %v772
    %v774 = vmul.f32 %v773, %v772
    %v775 = vmul.f32 %v774, %v773
    %v776 = vmul.f32 0.5, %v775
    %v777 = vsub.f32 1.5, %v776
    %v778 = vmul.f32 %v773, %v777
    %v779 = vmul.f32 %v772, %v778
    %vm780 = vcmp.eq.f32.partialorder %v772, inf
    %v781 = vsel %vm780, %v772, %v779
    %vm782 = vcmp.eq.f32.partialorder %v772, 0.0
    %v783 = vand.u32 %v772, 2147483648
    %v784 = vsel %vm782, %v783, %v781
    %v785 = vadd.f32 %v784, 1e-07
    %v786 = vrcp.pop %v785
    %v787 = vmul.f32 %v785, %v786
    %v788 = vsub.f32 1.0, %v787
    %v789 = vmul.f32 %v786, %v788
    %v790 = vadd.f32 %v786, %v789
    %vm791 = vweird.f32 %v785
    %vm792 = vweird.f32 %v786
    %vm793 = vmor %vm791, %vm792
    %v794 = vsel %vm793, %v786, %v790
    %v795 = vand.u32 2147483647, %v785
    %vm796 = vcmp.eq.f32.partialorder %v795, 8.507059e+37
    %v797 = vand.u32 %v785, 2147483648
    %v798 = vor.u32 1.1754944e-38, %v797
    %v799 = vsel %vm796, %v798, %v794
    %v800 = vld [vmem:[#allocation5] sm:$0x1]
    %v801 = vld [vmem:[%s2] sm:$0x1]
    %v803 = vperm.slane %v800, 0
    %v805 = vmul.f32 %v803, %v799
    %v806 = vmul.f32 %v422, %v805
    %v808 = vperm.slane %v801, 0
    %v810 = vadd.f32 %v806, %v808
    %811 = vst [vmem:[#allocation8] sm:$0xff] %v810
    // Predicated region
    $region30: #{tpu_custom_call.1} parent=1 // pred_check
      _
    $region31: #{tpu_custom_call.1} parent=1 // pred_check_branch
      %813 = sbr.rel (0) target = $region33
    $region32: #{tpu_custom_call.1} parent=1 // pred_region
      %815 = vsyncadd [#allocation4], 64
      %s816 = sshll.u32 [#allocation8], 4
      %s817 = int_to_ptr.vmem [resolvable:$true] %s816
      %s818 = sshll.u32 %s4, 4
      %s819 = int_to_ptr.hbm [resolvable:$true] %s818
      %824 = dma.vmem_to_hbm [thread:$0]  %s817, 64, %s819, [#allocation4], 64, 64, 4
    $region33: #{tpu_custom_call.1} parent=1 // pred_fallthru
      _
    // Predicated region
    $region34: #{tpu_custom_call.1} parent=1 // pred_check
      _
    $region35: #{tpu_custom_call.1} parent=1 // pred_check_branch
      %826 = sbr.rel (0) target = $region37
    $region36: #{tpu_custom_call.1} parent=1 // pred_region
      %828 = dma.done [#allocation4], 128
    $region37: #{tpu_custom_call.1} parent=1 // pred_fallthru
      _
    %829 = vsyncpa [#allocation3], 1
    %830 = vsyncpa [#allocation6], 1
    %831 = vsyncpa [#allocation4], 1

</llo_original>
